<compile_context>
chip_gen: v7x
topology: tpu7x:2x2x1
jax: 0.10.0
libtpu: 0.0.40
codegen_flags: <defaults>
</compile_context>

<pallas_src>
import jax
import jax.numpy as jnp
from jax import lax
from jax.experimental import pallas as pl
from jax.experimental.pallas import tpu as pltpu

_SMOOTH = 1e-5


def _vmem_limit_bytes() -> int:
    """Generation-aware VMEM budget: ~3/4 of physical VMEM, capped at 100 MiB."""
    cap = 0
    try:
        info = pltpu.get_tpu_info()
        cap = int(getattr(info, "vmem_capacity_bytes", 0) or 0)
    except Exception:
        cap = 0
    if cap <= 0:
        cap = 64 * 1024 * 1024            # conservative fallback: v7x per-TC VMEM
    return int(min((cap * 3) // 4, 100 * 1024 * 1024))


def _choose_row_tile(num_channels, n_rows, pred_isz, targ_isz, vmem_limit,
                     row_tile=None):
    """Rows (of 128 lanes) per spatial grid step.  Always a multiple of 8."""
    max_rt = (n_rows // 8) * 8            # n_rows >= 8 guaranteed by the wrapper
    if row_tile is not None:
        rt = int(row_tile)
        assert rt % 8 == 0, "row_tile must be a multiple of 8"
        return max(8, min(rt, max_rt))
    # Per row-of-128-lanes VMEM in flight: double-buffered inputs (at the real
    # itemsize -> bf16 inputs get 2x bigger tiles) + a rough f32 working set
    # for the softmax temps (m, den, e0, e1, p0, p1, t, folds, ...).
    per_row = 128 * (2 * (num_channels * int(pred_isz) + int(targ_isz))
                     + 4 * (num_channels + 8))
    budget = max(vmem_limit - 6 * 1024 * 1024, 2 * 1024 * 1024)
    cap = max(8, min(2048, (budget // per_row) // 8 * 8))
    n_steps = -(-n_rows // cap)           # spatial steps needed at this cap
    rt = ((-(-n_rows // n_steps) + 7) // 8) * 8   # balance rows across steps
    if rt > n_rows:
        rt = max_rt
    return rt


def _make_dice_kernel(num_channels, row_tile, valid_elems, n_chunks,
                      steps_per_chunk, n_spatial_total, needs_mask):
    """Kernel closed over static channel count / tile geometry."""
    tile_elems = row_tile * 128
    two_class = (num_channels == 2)

    def dice_kernel(pred_ref, targ_ref, acc_ref):
        g = pl.program_id(0)              # fused (batch, spatial-chunk) axis
        s = pl.program_id(1)              # spatial step within the chunk

        # --- init the per-(batch,chunk) resident accumulator at s == 0 ------
        @pl.when(s == 0)
        def _():
            acc_ref[...] = jnp.zeros_like(acc_ref)

        def chan(c):
            return pred_ref[0, c].astype(jnp.float32)          # (rt, 128)

        def fold(x):
            # (rt, 128) -> (8, 128): pure vreg adds on the VPU, no cross-lane
            # XLU work.  The final scalar reduce happens once in the wrapper.
            return jnp.sum(x.reshape(-1, 8, 128), axis=0)

        def accumulate(valid):
            t = targ_ref[0].astype(jnp.float32)                # (rt, 128)
            if two_class:
                # softmax over 2 channels == sigmoid(x0 - x1); the p1 sums are
                # recovered algebraically in the wrapper.
                p0 = 1.0 / (1.0 + jnp.exp(chan(1) - chan(0)))
                p1 = None
            else:
                # Two-pass numerically-stable softmax; keep e0/e1 live so the
                # exponentials are NOT recomputed for p0/p1 (C transcendentals
                # per pixel instead of C + 2, and no extra channel re-reads).
                m = chan(0)
                for c in range(1, num_channels):
                    m = jnp.maximum(m, chan(c))
                e0 = jnp.exp(chan(0) - m)
                e1 = jnp.exp(chan(1) - m)
                den = e0 + e1
                for c in range(2, num_channels):
                    den = den + jnp.exp(chan(c) - m)
                inv_den = 1.0 / den       # exact divide (kernel is HBM-bound)
                p0 = e0 * inv_den
                p1 = e1 * inv_den
            if valid is not None:
                # jnp.where (not multiply) so NaN/Inf garbage in the ragged
                # partial block / padded lanes cannot leak into the sums.
                t = jnp.where(valid, t, 0.0)
                p0 = jnp.where(valid, p0, 0.0)
                if p1 is not None:
                    p1 = jnp.where(valid, p1, 0.0)
            acc_ref[0, 0] = acc_ref[0, 0] + fold(t)            # sum(t)
            acc_ref[0, 1] = acc_ref[0, 1] + fold(p0)           # sum(p0)
            acc_ref[0, 2] = acc_ref[0, 2] + fold(p0 * t)       # sum(p0*t)
            if p1 is not None:
                acc_ref[0, 3] = acc_ref[0, 3] + fold(p1)       # sum(p1)
                acc_ref[0, 4] = acc_ref[0, 4] + fold(p1 * t)   # sum(p1*t)

        if needs_mask:
            # Only the globally-last spatial tile can contain padded lanes or
            # out-of-bounds rows; interior tiles skip the mask entirely.
            if n_chunks > 1:
                gblk = (g % n_chunks) * steps_per_chunk + s
            else:
                gblk = s
            is_last = gblk == (n_spatial_total - 1)

            @pl.when(jnp.logical_not(is_last))
            def _():
                accumulate(None)

            @pl.when(is_last)
            def _():
                rid = lax.broadcasted_iota(jnp.int32, (row_tile, 128), 0)
                lid = lax.broadcasted_iota(jnp.int32, (row_tile, 128), 1)
                gidx = gblk * tile_elems + rid * 128 + lid
                accumulate(gidx < valid_elems)
        else:
            accumulate(None)

    return dice_kernel


def dice_loss_pallas(predicts: jax.Array, target: jax.Array, *,
                     row_tile=None, spatial_chunks=None) -> jax.Array:
    """predicts: (N, C, H, W) float (f32/bf16/...); target: (N, H, W) in {0,1}."""
    N, C, H, W = predicts.shape
    assert target.shape == (N, H, W)
    assert C >= 2, "Dice_Loss uses softmax channels 0 and 1; need C >= 2"

    S = H * W
    n_rows = max(-(-S // 128), 8)         # >= 8 so (8,128) folds always apply
    s_pad = n_rows * 128

    p = predicts.reshape(N, C, S)
    t = target.reshape(N, S)
    if s_pad != S:
        # Pad only up to the next 128-lane row boundary (and a minimum of 8
        # rows for tiny inputs).  Row-tile raggedness is handled with Pallas
        # partial blocks + the in-kernel mask, so no rt-multiple padded copy
        # of `predicts` is ever materialized.  When H*W is already a multiple
        # of 128 (typical image sizes) there is no copy at all.
        p = jnp.pad(p, ((0, 0), (0, 0), (0, s_pad - S)))
        t = jnp.pad(t, ((0, 0), (0, s_pad - S)))
    p = p.reshape(N, C, n_rows, 128)
    t = t.reshape(N, n_rows, 128)

    vmem_limit = _vmem_limit_bytes()
    rt = _choose_row_tile(C, n_rows, predicts.dtype.itemsize,
                          target.dtype.itemsize, vmem_limit, row_tile)
    n_spatial = -(-n_rows // rt)
    needs_mask = (n_spatial * rt * 128 != S)

    # Split the spatial reduction across 2 "parallel" chunks when the batch
    # axis alone cannot keep both v7x TensorCores busy (N odd / N == 1).
    # Harmless on single-TC parts (just one extra accumulator per batch).
    if spatial_chunks is None:
        spatial_chunks = 2 if (N % 2 == 1 and n_spatial >= 2
                               and n_spatial % 2 == 0) else 1
    n_chunks = spatial_chunks if (spatial_chunks >= 1
                                  and n_spatial % spatial_chunks == 0) else 1
    spc = n_spatial // n_chunks
    G = N * n_chunks

    n_out = 3 if C == 2 else 5
    kernel = _make_dice_kernel(C, rt, S, n_chunks, spc, n_spatial, needs_mask)

    if n_chunks == 1:
        pred_map = lambda g, s2: (g, 0, s2, 0)
        targ_map = lambda g, s2: (g, s2, 0)
    else:
        pred_map = lambda g, s2: (g // n_chunks, 0, (g % n_chunks) * spc + s2, 0)
        targ_map = lambda g, s2: (g // n_chunks, (g % n_chunks) * spc + s2, 0)

    cost = pl.CostEstimate(
        flops=int(N * S * (6 * C + 16)),
        transcendentals=int(N * S * (1 if C == 2 else C)),
        bytes_accessed=int(predicts.size * predicts.dtype.itemsize
                           + target.size * target.dtype.itemsize
                           + G * n_out * 8 * 128 * 4),
    )

    acc = pl.pallas_call(
        kernel,
        out_shape=jax.ShapeDtypeStruct((G, n_out, 8, 128), jnp.float32),
        grid_spec=pltpu.PrefetchScalarGridSpec(
            num_scalar_prefetch=0,
            grid=(G, spc),
            in_specs=[
                pl.BlockSpec((1, C, rt, 128), pred_map),
                pl.BlockSpec((1, rt, 128), targ_map),
            ],
            out_specs=pl.BlockSpec((1, n_out, 8, 128),
                                   lambda g, s2: (g, 0, 0, 0)),
        ),
        compiler_params=pltpu.CompilerParams(
            dimension_semantics=("parallel", "arbitrary"),
            vmem_limit_bytes=int(vmem_limit),
        ),
        cost_estimate=cost,
    )(p, t)

    # --- tiny per-batch finalize in plain JAX ------------------------------
    sums = jnp.sum(acc, axis=(2, 3)).reshape(N, n_chunks, n_out).sum(axis=1)
    sum_t, sum_p0, sum_p0t = sums[:, 0], sums[:, 1], sums[:, 2]
    count = jnp.float32(S)
    if C == 2:
        sum_p1 = count - sum_p0           # p0 + p1 == 1 at every valid pixel
        sum_p1t = sum_t - sum_p0t
    else:
        sum_p1, sum_p1t = sums[:, 3], sums[:, 4]

    inter0 = sum_p0 - sum_p0t             # sum(p0 * (1 - t))
    union0 = sum_p0 + (count - sum_t) + _SMOOTH
    dice0 = 1.0 - 2.0 * inter0 / union0

    inter1 = sum_p1t                      # sum(p1 * t)
    union1 = sum_p1 + sum_t + _SMOOTH
    dice1 = 1.0 - 2.0 * inter1 / union1

    return (jnp.mean(dice0) + jnp.mean(dice1)) / 2.0


def dice_loss_ref(predicts: jax.Array, target: jax.Array) -> jax.Array:
    """Pure-JAX reference mirroring the PyTorch module."""
    preds = jax.nn.softmax(predicts.astype(jnp.float32), axis=1)

    def _dice(pr, tr):
        n = pr.shape[0]
        pf = pr.reshape(n, -1)
        tf = tr.reshape(n, -1)
        inter = jnp.sum(pf * tf, axis=1)
        union = jnp.sum(pf, axis=1) + jnp.sum(tf, axis=1) + _SMOOTH
        return 1.0 - 2.0 * inter / union

    tt = target.astype(jnp.float32)
    d0 = _dice(preds[:, 0, :, :], 1.0 - tt)
    d1 = _dice(preds[:, 1, :, :], tt)
    return (d0.mean() + d1.mean()) / 2.0


if __name__ == "__main__":
    key = jax.random.PRNGKey(0)
    cases = [
        # (N, C, H, W, dtype, kwargs)
        (2, 4, 16, 16, jnp.float32, {}),               # C>2 two-pass softmax path
        (2, 2, 5, 7, jnp.float32, {}),                 # C==2 sigmoid path + lane pad/mask
        (2, 3, 34, 34, jnp.float32, {"row_tile": 8}),  # multi-step grid + ragged last tile
        (1, 2, 32, 64, jnp.float32, {"row_tile": 8}),  # odd N -> 2-chunk spatial split
        (1, 3, 34, 34, jnp.float32, {"row_tile": 8}),  # chunked + masked last tile
        (2, 2, 16, 16, jnp.bfloat16, {}),              # bf16 inputs (itemsize-aware tiles)
    ]
    for (n, c, h, w, dtype, kw) in cases:
        key, k1, k2 = jax.random.split(key, 3)
        predicts = jax.random.normal(k1, (n, c, h, w), dtype=jnp.float32).astype(dtype)
        target = (jax.random.uniform(k2, (n, h, w)) > 0.5).astype(jnp.float32)
        out = jax.block_until_ready(dice_loss_pallas(predicts, target, **kw))
        ref = dice_loss_ref(predicts, target)
        assert jnp.allclose(out, ref, atol=2e-4, rtol=2e-4), (out, ref, (n, c, h, w))

    print("KERNEL_OK")
</pallas_src>

<mosaic_0001>
module attributes {stable_mosaic.version = 11 : i64} {
  func.func @dice_kernel(%arg0: i32, %arg1: i32, %arg2: memref<1x4x8x128xf32, #tpu.memory_space<vmem>>, %arg3: memref<1x8x128xf32, #tpu.memory_space<vmem>>, %arg4: memref<1x5x8x128xf32, #tpu.memory_space<vmem>>) attributes {dimension_semantics = [#tpu.dimension_semantics<parallel>, #tpu.dimension_semantics<arbitrary>], iteration_bounds = array<i64: 2, 1>, scalar_prefetch = 0 : i64, scratch_operands = 0 : i64, tpu.core_type = #tpu.core_type<tc>, window_params = [{transform_indices = @transform_0, window_bounds = array<i64: 1, 4, 8, 128>}, {transform_indices = @transform_1, window_bounds = array<i64: 1, 8, 128>}, {transform_indices = @transform_2, window_bounds = array<i64: 1, 5, 8, 128>}]} {
    %c0_i32 = arith.constant 0 : i32
    %0 = arith.cmpi eq, %arg1, %c0_i32 : i32
    %1 = arith.extui %0 : i1 to i32
    %c0_i32_0 = arith.constant 0 : i32
    %2 = arith.cmpi ne, %1, %c0_i32_0 : i32
    scf.if %2 {
      %cst = arith.constant 0.000000e+00 : f32
      %9 = vector.broadcast %cst : f32 to vector<1x5x8x128xf32>
      %c0 = arith.constant 0 : index
      %c0_4 = arith.constant 0 : index
      %c0_5 = arith.constant 0 : index
      %c0_6 = arith.constant 0 : index
      %10 = vector.load %arg4[%c0, %c0_4, %c0_5, %c0_6] : memref<1x5x8x128xf32, #tpu.memory_space<vmem>>, vector<1x5x8x128xf32>
      tpu.vector_store %arg4[%c0, %c0_4, %c0_5, %c0_6], %9 {strides = array<i32>} : memref<1x5x8x128xf32, #tpu.memory_space<vmem>>, vector<1x5x8x128xf32>,
    } else {
    }
    %c0_i32_1 = arith.constant 0 : i32
    %3 = arith.cmpi eq, %arg1, %c0_i32_1 : i32
    %true = arith.constant true
    %4 = arith.xori %3, %true : i1
    %5 = arith.extui %4 : i1 to i32
    %c0_i32_2 = arith.constant 0 : i32
    %6 = arith.cmpi ne, %5, %c0_i32_2 : i32
    scf.if %6 {
      %c0 = arith.constant 0 : index
      %c0_4 = arith.constant 0 : index
      %c0_5 = arith.constant 0 : index
      %9 = vector.load %arg3[%c0, %c0_4, %c0_5] : memref<1x8x128xf32, #tpu.memory_space<vmem>>, vector<1x8x128xf32>
      %10 = vector.shape_cast %9 : vector<1x8x128xf32> to vector<8x128xf32>
      %c0_6 = arith.constant 0 : index
      %c0_7 = arith.constant 0 : index
      %c0_8 = arith.constant 0 : index
      %c0_9 = arith.constant 0 : index
      %11 = vector.load %arg2[%c0_6, %c0_7, %c0_8, %c0_9] : memref<1x4x8x128xf32, #tpu.memory_space<vmem>>, vector<1x1x8x128xf32>
      %12 = vector.shape_cast %11 : vector<1x1x8x128xf32> to vector<8x128xf32>
      %c0_10 = arith.constant 0 : index
      %c1 = arith.constant 1 : index
      %c0_11 = arith.constant 0 : index
      %c0_12 = arith.constant 0 : index
      %13 = vector.load %arg2[%c0_10, %c1, %c0_11, %c0_12] : memref<1x4x8x128xf32, #tpu.memory_space<vmem>>, vector<1x1x8x128xf32>
      %14 = vector.shape_cast %13 : vector<1x1x8x128xf32> to vector<8x128xf32>
      %15 = arith.maximumf %12, %14 : vector<8x128xf32>
      %c0_13 = arith.constant 0 : index
      %c2 = arith.constant 2 : index
      %c0_14 = arith.constant 0 : index
      %c0_15 = arith.constant 0 : index
      %16 = vector.load %arg2[%c0_13, %c2, %c0_14, %c0_15] : memref<1x4x8x128xf32, #tpu.memory_space<vmem>>, vector<1x1x8x128xf32>
      %17 = vector.shape_cast %16 : vector<1x1x8x128xf32> to vector<8x128xf32>
      %18 = arith.maximumf %15, %17 : vector<8x128xf32>
      %c0_16 = arith.constant 0 : index
      %c3 = arith.constant 3 : index
      %c0_17 = arith.constant 0 : index
      %c0_18 = arith.constant 0 : index
      %19 = vector.load %arg2[%c0_16, %c3, %c0_17, %c0_18] : memref<1x4x8x128xf32, #tpu.memory_space<vmem>>, vector<1x1x8x128xf32>
      %20 = vector.shape_cast %19 : vector<1x1x8x128xf32> to vector<8x128xf32>
      %21 = arith.maximumf %18, %20 : vector<8x128xf32>
      %c0_19 = arith.constant 0 : index
      %c0_20 = arith.constant 0 : index
      %c0_21 = arith.constant 0 : index
      %c0_22 = arith.constant 0 : index
      %22 = vector.load %arg2[%c0_19, %c0_20, %c0_21, %c0_22] : memref<1x4x8x128xf32, #tpu.memory_space<vmem>>, vector<1x1x8x128xf32>
      %23 = vector.shape_cast %22 : vector<1x1x8x128xf32> to vector<8x128xf32>
      %24 = arith.subf %23, %21 : vector<8x128xf32>
      %25 = math.exp %24 : vector<8x128xf32>
      %c0_23 = arith.constant 0 : index
      %c1_24 = arith.constant 1 : index
      %c0_25 = arith.constant 0 : index
      %c0_26 = arith.constant 0 : index
      %26 = vector.load %arg2[%c0_23, %c1_24, %c0_25, %c0_26] : memref<1x4x8x128xf32, #tpu.memory_space<vmem>>, vector<1x1x8x128xf32>
      %27 = vector.shape_cast %26 : vector<1x1x8x128xf32> to vector<8x128xf32>
      %28 = arith.subf %27, %21 : vector<8x128xf32>
      %29 = math.exp %28 : vector<8x128xf32>
      %30 = arith.addf %25, %29 : vector<8x128xf32>
      %c0_27 = arith.constant 0 : index
      %c2_28 = arith.constant 2 : index
      %c0_29 = arith.constant 0 : index
      %c0_30 = arith.constant 0 : index
      %31 = vector.load %arg2[%c0_27, %c2_28, %c0_29, %c0_30] : memref<1x4x8x128xf32, #tpu.memory_space<vmem>>, vector<1x1x8x128xf32>
      %32 = vector.shape_cast %31 : vector<1x1x8x128xf32> to vector<8x128xf32>
      %33 = arith.subf %32, %21 : vector<8x128xf32>
      %34 = math.exp %33 : vector<8x128xf32>
      %35 = arith.addf %30, %34 : vector<8x128xf32>
      %c0_31 = arith.constant 0 : index
      %c3_32 = arith.constant 3 : index
      %c0_33 = arith.constant 0 : index
      %c0_34 = arith.constant 0 : index
      %36 = vector.load %arg2[%c0_31, %c3_32, %c0_33, %c0_34] : memref<1x4x8x128xf32, #tpu.memory_space<vmem>>, vector<1x1x8x128xf32>
      %37 = vector.shape_cast %36 : vector<1x1x8x128xf32> to vector<8x128xf32>
      %38 = arith.subf %37, %21 : vector<8x128xf32>
      %39 = math.exp %38 : vector<8x128xf32>
      %40 = arith.addf %35, %39 : vector<8x128xf32>
      %cst = arith.constant 1.000000e+00 : f32
      %41 = vector.broadcast %cst : f32 to vector<8x128xf32>
      %42 = arith.divf %41, %40 : vector<8x128xf32>
      %43 = arith.mulf %25, %42 : vector<8x128xf32>
      %44 = arith.mulf %29, %42 : vector<8x128xf32>
      %c0_35 = arith.constant 0 : index
      %c0_36 = arith.constant 0 : index
      %c0_37 = arith.constant 0 : index
      %c0_38 = arith.constant 0 : index
      %45 = vector.load %arg4[%c0_35, %c0_36, %c0_37, %c0_38] : memref<1x5x8x128xf32, #tpu.memory_space<vmem>>, vector<1x1x8x128xf32>
      %46 = vector.shape_cast %45 : vector<1x1x8x128xf32> to vector<8x128xf32>
      %47 = vector.shape_cast %10 : vector<8x128xf32> to vector<1x8x128xf32>
      %cst_39 = arith.constant dense<0.000000e+00> : vector<8x128xf32>
      %48 = vector.multi_reduction <add>, %47, %cst_39 [0] : vector<1x8x128xf32> to vector<8x128xf32>
      %49 = arith.addf %46, %48 : vector<8x128xf32>
      %c0_40 = arith.constant 0 : index
      %c0_41 = arith.constant 0 : index
      %c0_42 = arith.constant 0 : index
      %c0_43 = arith.constant 0 : index
      %50 = vector.load %arg4[%c0_40, %c0_41, %c0_42, %c0_43] : memref<1x5x8x128xf32, #tpu.memory_space<vmem>>, vector<1x1x8x128xf32>
      %51 = vector.shape_cast %50 : vector<1x1x8x128xf32> to vector<8x128xf32>
      %52 = vector.shape_cast %49 : vector<8x128xf32> to vector<1x1x8x128xf32>
      tpu.vector_store %arg4[%c0_40, %c0_41, %c0_42, %c0_43], %52 {strides = array<i32>} : memref<1x5x8x128xf32, #tpu.memory_space<vmem>>, vector<1x1x8x128xf32>,
      %c0_44 = arith.constant 0 : index
      %c1_45 = arith.constant 1 : index
      %c0_46 = arith.constant 0 : index
      %c0_47 = arith.constant 0 : index
      %53 = vector.load %arg4[%c0_44, %c1_45, %c0_46, %c0_47] : memref<1x5x8x128xf32, #tpu.memory_space<vmem>>, vector<1x1x8x128xf32>
      %54 = vector.shape_cast %53 : vector<1x1x8x128xf32> to vector<8x128xf32>
      %55 = vector.shape_cast %43 : vector<8x128xf32> to vector<1x8x128xf32>
      %cst_48 = arith.constant dense<0.000000e+00> : vector<8x128xf32>
      %56 = vector.multi_reduction <add>, %55, %cst_48 [0] : vector<1x8x128xf32> to vector<8x128xf32>
      %57 = arith.addf %54, %56 : vector<8x128xf32>
      %c0_49 = arith.constant 0 : index
      %c1_50 = arith.constant 1 : index
      %c0_51 = arith.constant 0 : index
      %c0_52 = arith.constant 0 : index
      %58 = vector.load %arg4[%c0_49, %c1_50, %c0_51, %c0_52] : memref<1x5x8x128xf32, #tpu.memory_space<vmem>>, vector<1x1x8x128xf32>
      %59 = vector.shape_cast %58 : vector<1x1x8x128xf32> to vector<8x128xf32>
      %60 = vector.shape_cast %57 : vector<8x128xf32> to vector<1x1x8x128xf32>
      tpu.vector_store %arg4[%c0_49, %c1_50, %c0_51, %c0_52], %60 {strides = array<i32>} : memref<1x5x8x128xf32, #tpu.memory_space<vmem>>, vector<1x1x8x128xf32>,
      %c0_53 = arith.constant 0 : index
      %c2_54 = arith.constant 2 : index
      %c0_55 = arith.constant 0 : index
      %c0_56 = arith.constant 0 : index
      %61 = vector.load %arg4[%c0_53, %c2_54, %c0_55, %c0_56] : memref<1x5x8x128xf32, #tpu.memory_space<vmem>>, vector<1x1x8x128xf32>
      %62 = vector.shape_cast %61 : vector<1x1x8x128xf32> to vector<8x128xf32>
      %63 = arith.mulf %43, %10 : vector<8x128xf32>
      %64 = vector.shape_cast %63 : vector<8x128xf32> to vector<1x8x128xf32>
      %cst_57 = arith.constant dense<0.000000e+00> : vector<8x128xf32>
      %65 = vector.multi_reduction <add>, %64, %cst_57 [0] : vector<1x8x128xf32> to vector<8x128xf32>
      %66 = arith.addf %62, %65 : vector<8x128xf32>
      %c0_58 = arith.constant 0 : index
      %c2_59 = arith.constant 2 : index
      %c0_60 = arith.constant 0 : index
      %c0_61 = arith.constant 0 : index
      %67 = vector.load %arg4[%c0_58, %c2_59, %c0_60, %c0_61] : memref<1x5x8x128xf32, #tpu.memory_space<vmem>>, vector<1x1x8x128xf32>
      %68 = vector.shape_cast %67 : vector<1x1x8x128xf32> to vector<8x128xf32>
      %69 = vector.shape_cast %66 : vector<8x128xf32> to vector<1x1x8x128xf32>
      tpu.vector_store %arg4[%c0_58, %c2_59, %c0_60, %c0_61], %69 {strides = array<i32>} : memref<1x5x8x128xf32, #tpu.memory_space<vmem>>, vector<1x1x8x128xf32>,
      %c0_62 = arith.constant 0 : index
      %c3_63 = arith.constant 3 : index
      %c0_64 = arith.constant 0 : index
      %c0_65 = arith.constant 0 : index
      %70 = vector.load %arg4[%c0_62, %c3_63, %c0_64, %c0_65] : memref<1x5x8x128xf32, #tpu.memory_space<vmem>>, vector<1x1x8x128xf32>
      %71 = vector.shape_cast %70 : vector<1x1x8x128xf32> to vector<8x128xf32>
      %72 = vector.shape_cast %44 : vector<8x128xf32> to vector<1x8x128xf32>
      %cst_66 = arith.constant dense<0.000000e+00> : vector<8x128xf32>
      %73 = vector.multi_reduction <add>, %72, %cst_66 [0] : vector<1x8x128xf32> to vector<8x128xf32>
      %74 = arith.addf %71, %73 : vector<8x128xf32>
      %c0_67 = arith.constant 0 : index
      %c3_68 = arith.constant 3 : index
      %c0_69 = arith.constant 0 : index
      %c0_70 = arith.constant 0 : index
      %75 = vector.load %arg4[%c0_67, %c3_68, %c0_69, %c0_70] : memref<1x5x8x128xf32, #tpu.memory_space<vmem>>, vector<1x1x8x128xf32>
      %76 = vector.shape_cast %75 : vector<1x1x8x128xf32> to vector<8x128xf32>
      %77 = vector.shape_cast %74 : vector<8x128xf32> to vector<1x1x8x128xf32>
      tpu.vector_store %arg4[%c0_67, %c3_68, %c0_69, %c0_70], %77 {strides = array<i32>} : memref<1x5x8x128xf32, #tpu.memory_space<vmem>>, vector<1x1x8x128xf32>,
      %c0_71 = arith.constant 0 : index
      %c4 = arith.constant 4 : index
      %c0_72 = arith.constant 0 : index
      %c0_73 = arith.constant 0 : index
      %78 = vector.load %arg4[%c0_71, %c4, %c0_72, %c0_73] : memref<1x5x8x128xf32, #tpu.memory_space<vmem>>, vector<1x1x8x128xf32>
      %79 = vector.shape_cast %78 : vector<1x1x8x128xf32> to vector<8x128xf32>
      %80 = arith.mulf %44, %10 : vector<8x128xf32>
      %81 = vector.shape_cast %80 : vector<8x128xf32> to vector<1x8x128xf32>
      %cst_74 = arith.constant dense<0.000000e+00> : vector<8x128xf32>
      %82 = vector.multi_reduction <add>, %81, %cst_74 [0] : vector<1x8x128xf32> to vector<8x128xf32>
      %83 = arith.addf %79, %82 : vector<8x128xf32>
      %c0_75 = arith.constant 0 : index
      %c4_76 = arith.constant 4 : index
      %c0_77 = arith.constant 0 : index
      %c0_78 = arith.constant 0 : index
      %84 = vector.load %arg4[%c0_75, %c4_76, %c0_77, %c0_78] : memref<1x5x8x128xf32, #tpu.memory_space<vmem>>, vector<1x1x8x128xf32>
      %85 = vector.shape_cast %84 : vector<1x1x8x128xf32> to vector<8x128xf32>
      %86 = vector.shape_cast %83 : vector<8x128xf32> to vector<1x1x8x128xf32>
      tpu.vector_store %arg4[%c0_75, %c4_76, %c0_77, %c0_78], %86 {strides = array<i32>} : memref<1x5x8x128xf32, #tpu.memory_space<vmem>>, vector<1x1x8x128xf32>,
    } else {
    }
    %7 = arith.extui %3 : i1 to i32
    %c0_i32_3 = arith.constant 0 : i32
    %8 = arith.cmpi ne, %7, %c0_i32_3 : i32
    scf.if %8 {
      %9 = tpu.iota {dimensions = array<i32: 0>} : vector<8x128xi32>
      %10 = tpu.iota {dimensions = array<i32: 1>} : vector<8x128xi32>
      %c1024_i32 = arith.constant 1024 : i32
      %11 = arith.muli %arg1, %c1024_i32 : i32
      %c128_i32 = arith.constant 128 : i32
      %12 = vector.broadcast %c128_i32 : i32 to vector<8x128xi32>
      %13 = arith.muli %9, %12 : vector<8x128xi32>
      %14 = vector.broadcast %11 : i32 to vector<8x128xi32>
      %15 = arith.addi %14, %13 : vector<8x128xi32>
      %16 = arith.addi %15, %10 : vector<8x128xi32>
      %c256_i32 = arith.constant 256 : i32
      %17 = vector.broadcast %c256_i32 : i32 to vector<8x128xi32>
      %18 = arith.cmpi slt, %16, %17 : vector<8x128xi32>
      %c0 = arith.constant 0 : index
      %c0_4 = arith.constant 0 : index
      %c0_5 = arith.constant 0 : index
      %19 = vector.load %arg3[%c0, %c0_4, %c0_5] : memref<1x8x128xf32, #tpu.memory_space<vmem>>, vector<1x8x128xf32>
      %20 = vector.shape_cast %19 : vector<1x8x128xf32> to vector<8x128xf32>
      %c0_6 = arith.constant 0 : index
      %c0_7 = arith.constant 0 : index
      %c0_8 = arith.constant 0 : index
      %c0_9 = arith.constant 0 : index
      %21 = vector.load %arg2[%c0_6, %c0_7, %c0_8, %c0_9] : memref<1x4x8x128xf32, #tpu.memory_space<vmem>>, vector<1x1x8x128xf32>
      %22 = vector.shape_cast %21 : vector<1x1x8x128xf32> to vector<8x128xf32>
      %c0_10 = arith.constant 0 : index
      %c1 = arith.constant 1 : index
      %c0_11 = arith.constant 0 : index
      %c0_12 = arith.constant 0 : index
      %23 = vector.load %arg2[%c0_10, %c1, %c0_11, %c0_12] : memref<1x4x8x128xf32, #tpu.memory_space<vmem>>, vector<1x1x8x128xf32>
      %24 = vector.shape_cast %23 : vector<1x1x8x128xf32> to vector<8x128xf32>
      %25 = arith.maximumf %22, %24 : vector<8x128xf32>
      %c0_13 = arith.constant 0 : index
      %c2 = arith.constant 2 : index
      %c0_14 = arith.constant 0 : index
      %c0_15 = arith.constant 0 : index
      %26 = vector.load %arg2[%c0_13, %c2, %c0_14, %c0_15] : memref<1x4x8x128xf32, #tpu.memory_space<vmem>>, vector<1x1x8x128xf32>
      %27 = vector.shape_cast %26 : vector<1x1x8x128xf32> to vector<8x128xf32>
      %28 = arith.maximumf %25, %27 : vector<8x128xf32>
      %c0_16 = arith.constant 0 : index
      %c3 = arith.constant 3 : index
      %c0_17 = arith.constant 0 : index
      %c0_18 = arith.constant 0 : index
      %29 = vector.load %arg2[%c0_16, %c3, %c0_17, %c0_18] : memref<1x4x8x128xf32, #tpu.memory_space<vmem>>, vector<1x1x8x128xf32>
      %30 = vector.shape_cast %29 : vector<1x1x8x128xf32> to vector<8x128xf32>
      %31 = arith.maximumf %28, %30 : vector<8x128xf32>
      %c0_19 = arith.constant 0 : index
      %c0_20 = arith.constant 0 : index
      %c0_21 = arith.constant 0 : index
      %c0_22 = arith.constant 0 : index
      %32 = vector.load %arg2[%c0_19, %c0_20, %c0_21, %c0_22] : memref<1x4x8x128xf32, #tpu.memory_space<vmem>>, vector<1x1x8x128xf32>
      %33 = vector.shape_cast %32 : vector<1x1x8x128xf32> to vector<8x128xf32>
      %34 = arith.subf %33, %31 : vector<8x128xf32>
      %35 = math.exp %34 : vector<8x128xf32>
      %c0_23 = arith.constant 0 : index
      %c1_24 = arith.constant 1 : index
      %c0_25 = arith.constant 0 : index
      %c0_26 = arith.constant 0 : index
      %36 = vector.load %arg2[%c0_23, %c1_24, %c0_25, %c0_26] : memref<1x4x8x128xf32, #tpu.memory_space<vmem>>, vector<1x1x8x128xf32>
      %37 = vector.shape_cast %36 : vector<1x1x8x128xf32> to vector<8x128xf32>
      %38 = arith.subf %37, %31 : vector<8x128xf32>
      %39 = math.exp %38 : vector<8x128xf32>
      %40 = arith.addf %35, %39 : vector<8x128xf32>
      %c0_27 = arith.constant 0 : index
      %c2_28 = arith.constant 2 : index
      %c0_29 = arith.constant 0 : index
      %c0_30 = arith.constant 0 : index
      %41 = vector.load %arg2[%c0_27, %c2_28, %c0_29, %c0_30] : memref<1x4x8x128xf32, #tpu.memory_space<vmem>>, vector<1x1x8x128xf32>
      %42 = vector.shape_cast %41 : vector<1x1x8x128xf32> to vector<8x128xf32>
      %43 = arith.subf %42, %31 : vector<8x128xf32>
      %44 = math.exp %43 : vector<8x128xf32>
      %45 = arith.addf %40, %44 : vector<8x128xf32>
      %c0_31 = arith.constant 0 : index
      %c3_32 = arith.constant 3 : index
      %c0_33 = arith.constant 0 : index
      %c0_34 = arith.constant 0 : index
      %46 = vector.load %arg2[%c0_31, %c3_32, %c0_33, %c0_34] : memref<1x4x8x128xf32, #tpu.memory_space<vmem>>, vector<1x1x8x128xf32>
      %47 = vector.shape_cast %46 : vector<1x1x8x128xf32> to vector<8x128xf32>
      %48 = arith.subf %47, %31 : vector<8x128xf32>
      %49 = math.exp %48 : vector<8x128xf32>
      %50 = arith.addf %45, %49 : vector<8x128xf32>
      %cst = arith.constant 1.000000e+00 : f32
      %51 = vector.broadcast %cst : f32 to vector<8x128xf32>
      %52 = arith.divf %51, %50 : vector<8x128xf32>
      %53 = arith.mulf %35, %52 : vector<8x128xf32>
      %54 = arith.mulf %39, %52 : vector<8x128xf32>
      %cst_35 = arith.constant 0.000000e+00 : f32
      %55 = vector.broadcast %cst_35 : f32 to vector<8x128xf32>
      %56 = arith.select %18, %20, %55 : vector<8x128xi1>, vector<8x128xf32>
      %cst_36 = arith.constant 0.000000e+00 : f32
      %57 = vector.broadcast %cst_36 : f32 to vector<8x128xf32>
      %58 = arith.select %18, %53, %57 : vector<8x128xi1>, vector<8x128xf32>
      %cst_37 = arith.constant 0.000000e+00 : f32
      %59 = vector.broadcast %cst_37 : f32 to vector<8x128xf32>
      %60 = arith.select %18, %54, %59 : vector<8x128xi1>, vector<8x128xf32>
      %c0_38 = arith.constant 0 : index
      %c0_39 = arith.constant 0 : index
      %c0_40 = arith.constant 0 : index
      %c0_41 = arith.constant 0 : index
      %61 = vector.load %arg4[%c0_38, %c0_39, %c0_40, %c0_41] : memref<1x5x8x128xf32, #tpu.memory_space<vmem>>, vector<1x1x8x128xf32>
      %62 = vector.shape_cast %61 : vector<1x1x8x128xf32> to vector<8x128xf32>
      %63 = vector.shape_cast %56 : vector<8x128xf32> to vector<1x8x128xf32>
      %cst_42 = arith.constant dense<0.000000e+00> : vector<8x128xf32>
      %64 = vector.multi_reduction <add>, %63, %cst_42 [0] : vector<1x8x128xf32> to vector<8x128xf32>
      %65 = arith.addf %62, %64 : vector<8x128xf32>
      %c0_43 = arith.constant 0 : index
      %c0_44 = arith.constant 0 : index
      %c0_45 = arith.constant 0 : index
      %c0_46 = arith.constant 0 : index
      %66 = vector.load %arg4[%c0_43, %c0_44, %c0_45, %c0_46] : memref<1x5x8x128xf32, #tpu.memory_space<vmem>>, vector<1x1x8x128xf32>
      %67 = vector.shape_cast %66 : vector<1x1x8x128xf32> to vector<8x128xf32>
      %68 = vector.shape_cast %65 : vector<8x128xf32> to vector<1x1x8x128xf32>
      tpu.vector_store %arg4[%c0_43, %c0_44, %c0_45, %c0_46], %68 {strides = array<i32>} : memref<1x5x8x128xf32, #tpu.memory_space<vmem>>, vector<1x1x8x128xf32>,
      %c0_47 = arith.constant 0 : index
      %c1_48 = arith.constant 1 : index
      %c0_49 = arith.constant 0 : index
      %c0_50 = arith.constant 0 : index
      %69 = vector.load %arg4[%c0_47, %c1_48, %c0_49, %c0_50] : memref<1x5x8x128xf32, #tpu.memory_space<vmem>>, vector<1x1x8x128xf32>
      %70 = vector.shape_cast %69 : vector<1x1x8x128xf32> to vector<8x128xf32>
      %71 = vector.shape_cast %58 : vector<8x128xf32> to vector<1x8x128xf32>
      %cst_51 = arith.constant dense<0.000000e+00> : vector<8x128xf32>
      %72 = vector.multi_reduction <add>, %71, %cst_51 [0] : vector<1x8x128xf32> to vector<8x128xf32>
      %73 = arith.addf %70, %72 : vector<8x128xf32>
      %c0_52 = arith.constant 0 : index
      %c1_53 = arith.constant 1 : index
      %c0_54 = arith.constant 0 : index
      %c0_55 = arith.constant 0 : index
      %74 = vector.load %arg4[%c0_52, %c1_53, %c0_54, %c0_55] : memref<1x5x8x128xf32, #tpu.memory_space<vmem>>, vector<1x1x8x128xf32>
      %75 = vector.shape_cast %74 : vector<1x1x8x128xf32> to vector<8x128xf32>
      %76 = vector.shape_cast %73 : vector<8x128xf32> to vector<1x1x8x128xf32>
      tpu.vector_store %arg4[%c0_52, %c1_53, %c0_54, %c0_55], %76 {strides = array<i32>} : memref<1x5x8x128xf32, #tpu.memory_space<vmem>>, vector<1x1x8x128xf32>,
      %c0_56 = arith.constant 0 : index
      %c2_57 = arith.constant 2 : index
      %c0_58 = arith.constant 0 : index
      %c0_59 = arith.constant 0 : index
      %77 = vector.load %arg4[%c0_56, %c2_57, %c0_58, %c0_59] : memref<1x5x8x128xf32, #tpu.memory_space<vmem>>, vector<1x1x8x128xf32>
      %78 = vector.shape_cast %77 : vector<1x1x8x128xf32> to vector<8x128xf32>
      %79 = arith.mulf %58, %56 : vector<8x128xf32>
      %80 = vector.shape_cast %79 : vector<8x128xf32> to vector<1x8x128xf32>
      %cst_60 = arith.constant dense<0.000000e+00> : vector<8x128xf32>
      %81 = vector.multi_reduction <add>, %80, %cst_60 [0] : vector<1x8x128xf32> to vector<8x128xf32>
      %82 = arith.addf %78, %81 : vector<8x128xf32>
      %c0_61 = arith.constant 0 : index
      %c2_62 = arith.constant 2 : index
      %c0_63 = arith.constant 0 : index
      %c0_64 = arith.constant 0 : index
      %83 = vector.load %arg4[%c0_61, %c2_62, %c0_63, %c0_64] : memref<1x5x8x128xf32, #tpu.memory_space<vmem>>, vector<1x1x8x128xf32>
      %84 = vector.shape_cast %83 : vector<1x1x8x128xf32> to vector<8x128xf32>
      %85 = vector.shape_cast %82 : vector<8x128xf32> to vector<1x1x8x128xf32>
      tpu.vector_store %arg4[%c0_61, %c2_62, %c0_63, %c0_64], %85 {strides = array<i32>} : memref<1x5x8x128xf32, #tpu.memory_space<vmem>>, vector<1x1x8x128xf32>,
      %c0_65 = arith.constant 0 : index
      %c3_66 = arith.constant 3 : index
      %c0_67 = arith.constant 0 : index
      %c0_68 = arith.constant 0 : index
      %86 = vector.load %arg4[%c0_65, %c3_66, %c0_67, %c0_68] : memref<1x5x8x128xf32, #tpu.memory_space<vmem>>, vector<1x1x8x128xf32>
      %87 = vector.shape_cast %86 : vector<1x1x8x128xf32> to vector<8x128xf32>
      %88 = vector.shape_cast %60 : vector<8x128xf32> to vector<1x8x128xf32>
      %cst_69 = arith.constant dense<0.000000e+00> : vector<8x128xf32>
      %89 = vector.multi_reduction <add>, %88, %cst_69 [0] : vector<1x8x128xf32> to vector<8x128xf32>
      %90 = arith.addf %87, %89 : vector<8x128xf32>
      %c0_70 = arith.constant 0 : index
      %c3_71 = arith.constant 3 : index
      %c0_72 = arith.constant 0 : index
      %c0_73 = arith.constant 0 : index
      %91 = vector.load %arg4[%c0_70, %c3_71, %c0_72, %c0_73] : memref<1x5x8x128xf32, #tpu.memory_space<vmem>>, vector<1x1x8x128xf32>
      %92 = vector.shape_cast %91 : vector<1x1x8x128xf32> to vector<8x128xf32>
      %93 = vector.shape_cast %90 : vector<8x128xf32> to vector<1x1x8x128xf32>
      tpu.vector_store %arg4[%c0_70, %c3_71, %c0_72, %c0_73], %93 {strides = array<i32>} : memref<1x5x8x128xf32, #tpu.memory_space<vmem>>, vector<1x1x8x128xf32>,
      %c0_74 = arith.constant 0 : index
      %c4 = arith.constant 4 : index
      %c0_75 = arith.constant 0 : index
      %c0_76 = arith.constant 0 : index
      %94 = vector.load %arg4[%c0_74, %c4, %c0_75, %c0_76] : memref<1x5x8x128xf32, #tpu.memory_space<vmem>>, vector<1x1x8x128xf32>
      %95 = vector.shape_cast %94 : vector<1x1x8x128xf32> to vector<8x128xf32>
      %96 = arith.mulf %60, %56 : vector<8x128xf32>
      %97 = vector.shape_cast %96 : vector<8x128xf32> to vector<1x8x128xf32>
      %cst_77 = arith.constant dense<0.000000e+00> : vector<8x128xf32>
      %98 = vector.multi_reduction <add>, %97, %cst_77 [0] : vector<1x8x128xf32> to vector<8x128xf32>
      %99 = arith.addf %95, %98 : vector<8x128xf32>
      %c0_78 = arith.constant 0 : index
      %c4_79 = arith.constant 4 : index
      %c0_80 = arith.constant 0 : index
      %c0_81 = arith.constant 0 : index
      %100 = vector.load %arg4[%c0_78, %c4_79, %c0_80, %c0_81] : memref<1x5x8x128xf32, #tpu.memory_space<vmem>>, vector<1x1x8x128xf32>
      %101 = vector.shape_cast %100 : vector<1x1x8x128xf32> to vector<8x128xf32>
      %102 = vector.shape_cast %99 : vector<8x128xf32> to vector<1x1x8x128xf32>
      tpu.vector_store %arg4[%c0_78, %c4_79, %c0_80, %c0_81], %102 {strides = array<i32>} : memref<1x5x8x128xf32, #tpu.memory_space<vmem>>, vector<1x1x8x128xf32>,
    } else {
    }
    return
  }
  func.func @transform_0(%arg0: i32, %arg1: i32) -> (i32, i32, i32, i32) {
    %c0_i32 = arith.constant 0 : i32
    %c0_i32_0 = arith.constant 0 : i32
    %c0_i32_1 = arith.constant 0 : i32
    return %arg0, %c0_i32, %arg1, %c0_i32_0 : i32, i32, i32, i32
  }
  func.func @transform_1(%arg0: i32, %arg1: i32) -> (i32, i32, i32) {
    %c0_i32 = arith.constant 0 : i32
    %c0_i32_0 = arith.constant 0 : i32
    return %arg0, %arg1, %c0_i32 : i32, i32, i32
  }
  func.func @transform_2(%arg0: i32, %arg1: i32) -> (i32, i32, i32, i32) {
    %c0_i32 = arith.constant 0 : i32
    %c0_i32_0 = arith.constant 0 : i32
    %c0_i32_1 = arith.constant 0 : i32
    %c0_i32_2 = arith.constant 0 : i32
    return %arg0, %c0_i32, %c0_i32_0, %c0_i32_1 : i32, i32, i32, i32
  }
}

</mosaic_0001>

<llo_original>
// kernel: tpu_custom_call.1
$region0: #{tpu_custom_call.1}
  #allocation0 [shape = 'u32[]', space=smem, size = 0x4, offset = 0x4, fixed_abs, tag = 'smem constant byte address 0x4 - core index']
  #allocation1 [shape = 'u32[144,128]{1,0:T(1,128)}', space=vmem, size = 0x12000, scoped, tag = 'internal scratch']
  %s0 = inlined_call_operand.hbm [shape: f32[2,4,8,128], index: 0, kind: input, shape index: {}]
  %s1 = inlined_call_operand.hbm [shape: f32[2,8,128], index: 1, kind: input, shape index: {}]
  %s2 = inlined_call_operand.hbm [shape: f32[2,5,8,128], index: 2, kind: output, shape index: {}]
  %s3 = sld [smem:[#allocation0]]
  $region61: #{tpu_custom_call.1} parent=0
    _
  %s5 = ssub.s32 1, %s3
  %s6 = scalar_select 0, %s5, %s3
  $region1: #{tpu_custom_call.1} parent=0
    #allocation2 [shape = 'u8[32768]{0}', space=vmem, size = 0x8000, scoped, tag = 'input window, operand 0']
    #allocation3 [shape = 's32[2]{0}', space=sflag, size = 0x8, scoped, tag = 'scoped memory for tpu_custom_call.1']
    #allocation4 [shape = 's32[2]{0}', space=sflag, size = 0x8, scoped, tag = 'scoped memory for tpu_custom_call.1']
    #allocation5 [shape = 'u8[8192]{0}', space=vmem, size = 0x2000, scoped, tag = 'input window, operand 1']
    #allocation6 [shape = 's32[2]{0}', space=sflag, size = 0x8, scoped, tag = 'scoped memory for tpu_custom_call.1']
    #allocation7 [shape = 'u8[40960]{0}', space=vmem, size = 0xa000, scoped, tag = 'output window, operand 0']
    %7 = vsyncpa [#allocation3], 0
    %s8 = scalar_lea.sflag [#allocation3], 1
    %9 = vsyncpa %s8, 0
    %10 = vsyncpa [#allocation6], 0
    %s11 = scalar_lea.sflag [#allocation6], 1
    %12 = vsyncpa %s11, 0
    %13 = vsyncpa [#allocation4], 0
    %s14 = scalar_lea.sflag [#allocation4], 1
    %15 = vsyncpa %s14, 0
    loop: start=0, step=1, limit=4
    $region2: #{tpu_custom_call.1} parent=1 // loop_pre_header
      _
    $region3: #{tpu_custom_call.1} parent=1 // loop_header
      %s17 = sphi 0, %s21
      %p18 = scmp.ge.s32.totalorder %s17, 4
      %s24 = sphi 0, %s36
      %s25 = sphi 0, %s32
      %s26 = sphi 0, %s24
      %s27 = sphi 0, %s25
      %s28 = sphi 0, %s26
      %s29 = sphi 0, %s27
      %s41 = sphi 0, %s43
      %s44 = sphi 0, %s41
      %s45 = sphi 0, %s44
      %s61 = sphi 0, %s45
      %s69 = sphi 0, %s71
      %s72 = sphi 0, %s69
      %s73 = sphi 0, %s72
      %s89 = sphi 0, %s73
      %s95 = sphi 0, %s97
      %s98 = sphi 0, %s95
      %s99 = sphi 0, %s98
      %s115 = sphi 0, %s99
    $region4: #{tpu_custom_call.1} parent=1 // loop_header_branch
      %20 = sbr.rel (%p18) target = $region8
    $region5: #{tpu_custom_call.1} parent=1 // loop_body
      %s22 = ssub.s32 %s17, 1
      %s23 = ssub.s32 %s17, 2
      %s30 = sadd.s32 1, %s25
      %p31 = scmp.ge.s32.totalorder %s30, 1
      %s32 = scalar_select %p31, 0, %s30
      %s33 = sadd.s32 1, %s24
      %s34 = scalar_select %p31, %s33, %s24
      %p35 = scmp.ge.s32.totalorder %s34, 2
      %s36 = scalar_select %p35, 0, %s34
      %s37 = ssub.s32 %s24, %s36
      %s38 = ssub.s32 %s25, %s32
      %s39 = sor.u32 %s37, %s38
      %p40 = scmp.eq.s32.totalorder %s39, 0
      %s42 = sadd.s32 %s41, 1
      %s43 = scalar_select %p40, %s41, %s42
      %p46 = pneg %p40
      %p47 = scmp.eq.s32.totalorder %s17, 1
      %p48 = por %p46, %p47
      %p49 = scmp.ne.s32.totalorder %s41, %s44
      %p50 = scmp.eq.s32.totalorder %s17, 0
      %p51 = por %p49, %p50
      %p52 = scmp.ne.s32.totalorder %s41, %s44
      %p53 = scmp.eq.s32.totalorder %s22, 1
      %p54 = por %p52, %p53
      %p55 = scmp.ne.s32.totalorder %s44, %s45
      %p56 = scmp.eq.s32.totalorder %s22, 0
      %p57 = por %p55, %p56
      %p58 = scmp.ne.s32.totalorder %s44, %s45
      %p59 = scmp.eq.s32.totalorder %s23, 1
      %p60 = por %p58, %p59
      %p62 = scmp.ne.s32.totalorder %s45, %s61
      %p63 = scmp.eq.s32.totalorder %s23, 0
      %p64 = por %p62, %p63
      %s65 = ssub.s32 %s24, %s36
      %s66 = ssub.s32 %s25, %s32
      %s67 = sor.u32 %s65, %s66
      %p68 = scmp.eq.s32.totalorder %s67, 0
      %s70 = sadd.s32 %s69, 1
      %s71 = scalar_select %p68, %s69, %s70
      %p74 = pneg %p68
      %p75 = scmp.eq.s32.totalorder %s17, 1
      %p76 = por %p74, %p75
      %p77 = scmp.ne.s32.totalorder %s69, %s72
      %p78 = scmp.eq.s32.totalorder %s17, 0
      %p79 = por %p77, %p78
      %p80 = scmp.ne.s32.totalorder %s69, %s72
      %p81 = scmp.eq.s32.totalorder %s22, 1
      %p82 = por %p80, %p81
      %p83 = scmp.ne.s32.totalorder %s72, %s73
      %p84 = scmp.eq.s32.totalorder %s22, 0
      %p85 = por %p83, %p84
      %p86 = scmp.ne.s32.totalorder %s72, %s73
      %p87 = scmp.eq.s32.totalorder %s23, 1
      %p88 = por %p86, %p87
      %p90 = scmp.ne.s32.totalorder %s73, %s89
      %p91 = scmp.eq.s32.totalorder %s23, 0
      %p92 = por %p90, %p91
      %s93 = ssub.s32 %s24, %s36
      %p94 = scmp.eq.s32.totalorder %s93, 0
      %s96 = sadd.s32 %s95, 1
      %s97 = scalar_select %p94, %s95, %s96
      %p100 = pneg %p94
      %p101 = scmp.eq.s32.totalorder %s17, 1
      %p102 = por %p100, %p101
      %p103 = scmp.ne.s32.totalorder %s95, %s98
      %p104 = scmp.eq.s32.totalorder %s17, 0
      %p105 = por %p103, %p104
      %p106 = scmp.ne.s32.totalorder %s95, %s98
      %p107 = scmp.eq.s32.totalorder %s22, 1
      %p108 = por %p106, %p107
      %p109 = scmp.ne.s32.totalorder %s98, %s99
      %p110 = scmp.eq.s32.totalorder %s22, 0
      %p111 = por %p109, %p110
      %p112 = scmp.ne.s32.totalorder %s98, %s99
      %p113 = scmp.eq.s32.totalorder %s23, 1
      %p114 = por %p112, %p113
      %p116 = scmp.ne.s32.totalorder %s99, %s115
      %p117 = scmp.eq.s32.totalorder %s23, 0
      %p118 = por %p116, %p117
      %p119 = scmp.le.s32.totalorder 1, %s17
      %p120 = scmp.lt.s32.totalorder %s17, 3
      %p121 = pnand %p119, %p120
      %p122 = pneg %p121
      // Predicated region
      $region9: #{tpu_custom_call.1} parent=5 // pred_check
        _
      $region10: #{tpu_custom_call.1} parent=5 // pred_check_branch
        %124 = sbr.rel (%p121) target = $region12
      $region11: #{tpu_custom_call.1} parent=5 // pred_region
        %s125 = ssub.s32 %s17, 1
      $region12: #{tpu_custom_call.1} parent=5 // pred_fallthru
        _
      %p126 = scmp.lt.s32.totalorder %s17, 2
      // Predicated region
      $region13: #{tpu_custom_call.1} parent=5 // pred_check
        %p127 = pneg %p126
      $region14: #{tpu_custom_call.1} parent=5 // pred_check_branch
        %129 = sbr.rel (%p127) target = $region16
      $region15: #{tpu_custom_call.1} parent=5 // pred_region
        // Predicated region
        $region17: #{tpu_custom_call.1} parent=15 // pred_check
          %p130 = pneg %p51
        $region18: #{tpu_custom_call.1} parent=15 // pred_check_branch
          %132 = sbr.rel (%p130) target = $region20
        $region19: #{tpu_custom_call.1} parent=15 // pred_region
          %s133 = sand.u32 %s41, 1
          %s134 = scalar_lea.sflag [#allocation3], %s133
          %s135 = sand.u32 %s41, 1
          %s136 = smul.addr %s135, 32
          %s137 = scalar_lea.vmem [#allocation2], %s136
          %s139 = ssub.s32 512, 512
          %140 = vsyncadd %s134, %s139
          %s141 = smul.addr %s24, 4
          %s142 = sadd.s32 %s25, %s141
          %s143 = smul.addr %s142, 128
          %s144 = scalar_lea.hbm %s0, %s143
          %s145 = sshll.u32 %s137, 4
          %s146 = int_to_ptr.vmem [resolvable:$true] %s145
          %151 = dma.hbm_to_vmem [thread:$0]  %s144, 512, %s146, %s134, 128, 128, 8
        $region20: #{tpu_custom_call.1} parent=15 // pred_fallthru
          _
        // Predicated region
        $region21: #{tpu_custom_call.1} parent=15 // pred_check
          %p152 = pneg %p79
        $region22: #{tpu_custom_call.1} parent=15 // pred_check_branch
          %154 = sbr.rel (%p152) target = $region24
        $region23: #{tpu_custom_call.1} parent=15 // pred_region
          %s155 = sand.u32 %s69, 1
          %s156 = scalar_lea.sflag [#allocation6], %s155
          %s157 = sand.u32 %s69, 1
          %s158 = smul.addr %s157, 8
          %s159 = scalar_lea.vmem [#allocation5], %s158
          %s161 = ssub.s32 128, 128
          %162 = vsyncadd %s156, %s161
          %s163 = sadd.s32 %s25, %s24
          %s164 = smul.addr %s163, 128
          %s165 = scalar_lea.hbm %s1, %s164
          %s167 = sshll.u32 %s159, 4
          %s168 = int_to_ptr.vmem [resolvable:$true] %s167
          %170 = dma.hbm_to_vmem [thread:$0]  %s165, 128, %s168, %s156
        $region24: #{tpu_custom_call.1} parent=15 // pred_fallthru
          _
      $region16: #{tpu_custom_call.1} parent=5 // pred_fallthru
        _
      %p171 = scmp.le.s32.totalorder 1, %s17
      %p172 = scmp.lt.s32.totalorder %s17, 3
      %p173 = pnand %p171, %p172
      %p174 = pneg %p173
      // Predicated region
      $region25: #{tpu_custom_call.1} parent=5 // pred_check
        _
      $region26: #{tpu_custom_call.1} parent=5 // pred_check_branch
        %176 = sbr.rel (%p173) target = $region28
      $region27: #{tpu_custom_call.1} parent=5 // pred_region
        %s177 = ssub.s32 %s17, 1
        %s178 = sand.u32 %s44, 1
        %s179 = scalar_lea.sflag [#allocation3], %s178
        %s180 = sand.u32 %s44, 1
        %s181 = smul.addr %s180, 32
        %s182 = scalar_lea.vmem [#allocation2], %s181
        // Predicated region
        $region29: #{tpu_custom_call.1} parent=27 // pred_check
          %p183 = pneg %p57
        $region30: #{tpu_custom_call.1} parent=27 // pred_check_branch
          %185 = sbr.rel (%p183) target = $region32
        $region31: #{tpu_custom_call.1} parent=27 // pred_region
          %186 = dma.done %s179, 512
        $region32: #{tpu_custom_call.1} parent=27 // pred_fallthru
          _
        %s187 = sand.u32 %s72, 1
        %s188 = scalar_lea.sflag [#allocation6], %s187
        %s189 = sand.u32 %s72, 1
        %s190 = smul.addr %s189, 8
        %s191 = scalar_lea.vmem [#allocation5], %s190
        // Predicated region
        $region33: #{tpu_custom_call.1} parent=27 // pred_check
          %p192 = pneg %p85
        $region34: #{tpu_custom_call.1} parent=27 // pred_check_branch
          %194 = sbr.rel (%p192) target = $region36
        $region35: #{tpu_custom_call.1} parent=27 // pred_region
          %195 = dma.done %s188, 128
        $region36: #{tpu_custom_call.1} parent=27 // pred_fallthru
          _
        %s196 = sand.u32 %s44, 1
        %s197 = scalar_lea.sflag [#allocation3], %s196
        %s198 = sand.u32 %s44, 1
        %s199 = smul.addr %s198, 32
        %s200 = scalar_lea.vmem [#allocation2], %s199
        %p201 = pneg %p57
        %p202 = pneg %p54
        %s203 = sand.u32 %s72, 1
        %s204 = scalar_lea.sflag [#allocation6], %s203
        %s205 = sand.u32 %s72, 1
        %s206 = smul.addr %s205, 8
        %s207 = scalar_lea.vmem [#allocation5], %s206
        %p208 = pneg %p85
        %p209 = pneg %p82
        %p210 = pneg %p111
        %p211 = pneg %p108
        %s212 = sand.u32 %s98, 1
        %s213 = scalar_lea.sflag [#allocation4], %s212
        %s214 = sand.u32 %s98, 1
        %s215 = smul.addr %s214, 40
        %s216 = scalar_lea.vmem [#allocation7], %s215
        %p217 = scmp.eq.s32.totalorder %s27, 0
        // Predicated region
        $region37: #{tpu_custom_call.1} parent=27 // pred_check
          %p218 = pneg %p217
        $region38: #{tpu_custom_call.1} parent=27 // pred_check_branch
          %220 = sbr.rel (%p218) target = $region40
        $region39: #{tpu_custom_call.1} parent=27 // pred_region
          %221 = vst [vmem:[%s216] sm:$0xff] 0.0
          %222 = vst [vmem:[%s216 + $0x8] sm:$0xff] 0.0
          %223 = vst [vmem:[%s216 + $0x10] sm:$0xff] 0.0
          %224 = vst [vmem:[%s216 + $0x18] sm:$0xff] 0.0
          %225 = vst [vmem:[%s216 + $0x20] sm:$0xff] 0.0
        $region40: #{tpu_custom_call.1} parent=27 // pred_fallthru
          _
        %p226 = scmp.ne.s32.totalorder %s27, 0
        // Predicated region
        $region41: #{tpu_custom_call.1} parent=27 // pred_check
          %p227 = pneg %p226
        $region42: #{tpu_custom_call.1} parent=27 // pred_check_branch
          %229 = sbr.rel (%p227) target = $region44
        $region43: #{tpu_custom_call.1} parent=27 // pred_region
          %v230 = vld [vmem:[%s191] sm:$0xff]
          %v231 = vld [vmem:[%s182] sm:$0xff]
          %s232 = scalar_lea.vmem %s182, 8 [#allocation2]
          %v233 = vld [vmem:[%s232] sm:$0xff]
          %v234 = vmax.f32 %v231, %v233
          %s235 = scalar_lea.vmem %s182, 16 [#allocation2]
          %v236 = vld [vmem:[%s235] sm:$0xff]
          %v237 = vmax.f32 %v234, %v236
          %s238 = scalar_lea.vmem %s182, 24 [#allocation2]
          %v239 = vld [vmem:[%s238] sm:$0xff]
          %v240 = vmax.f32 %v237, %v239
          %v241 = vsub.f32 %v231, %v240
          %v242 = vmul.f32 %v241, 1.442695
          %v243 = vpow.pop %v242
          %v244 = vsub.f32 %v233, %v240
          %v245 = vmul.f32 %v244, 1.442695
          %v246 = vpow.pop %v245
          %v247 = vadd.f32 %v243, %v246
          %v248 = vsub.f32 %v236, %v240
          %v249 = vmul.f32 %v248, 1.442695
          %v250 = vpow.pop %v249
          %v251 = vadd.f32 %v247, %v250
          %v252 = vsub.f32 %v239, %v240
          %v253 = vmul.f32 %v252, 1.442695
          %v254 = vpow.pop %v253
          %v255 = vadd.f32 %v251, %v254
          %v256 = vrcp.pop %v255
          %v257 = vmul.f32 1.0, %v256
          %v258 = vmul.f32 %v243, %v257
          %v259 = vmul.f32 %v246, %v257
          %v260 = vld [vmem:[%s216] sm:$0xff]
          %v261 = vadd.f32 %v230, 0.0
          %v262 = vadd.f32 %v260, %v261
          %263 = vst [vmem:[%s216] sm:$0xff] %v262
          %s264 = scalar_lea.vmem %s216, 8 [#allocation7]
          %v265 = vld [vmem:[%s264] sm:$0xff]
          %v266 = vadd.f32 %v258, 0.0
          %v267 = vadd.f32 %v265, %v266
          %268 = vst [vmem:[%s264] sm:$0xff] %v267
          %s269 = scalar_lea.vmem %s216, 16 [#allocation7]
          %v270 = vld [vmem:[%s269] sm:$0xff]
          %v271 = vmul.f32 %v258, %v230
          %v272 = vadd.f32 %v271, 0.0
          %v273 = vadd.f32 %v270, %v272
          %274 = vst [vmem:[%s269] sm:$0xff] %v273
          %s275 = scalar_lea.vmem %s216, 24 [#allocation7]
          %v276 = vld [vmem:[%s275] sm:$0xff]
          %v277 = vadd.f32 %v259, 0.0
          %v278 = vadd.f32 %v276, %v277
          %279 = vst [vmem:[%s275] sm:$0xff] %v278
          %s280 = scalar_lea.vmem %s216, 32 [#allocation7]
          %v281 = vld [vmem:[%s280] sm:$0xff]
          %v282 = vmul.f32 %v259, %v230
          %v283 = vadd.f32 %v282, 0.0
          %v284 = vadd.f32 %v281, %v283
          %285 = vst [vmem:[%s280] sm:$0xff] %v284
        $region44: #{tpu_custom_call.1} parent=27 // pred_fallthru
          _
        // Predicated region
        $region45: #{tpu_custom_call.1} parent=27 // pred_check
          %p286 = pneg %p217
        $region46: #{tpu_custom_call.1} parent=27 // pred_check_branch
          %288 = sbr.rel (%p286) target = $region48
        $region47: #{tpu_custom_call.1} parent=27 // pred_region
          %v289 = vlaneseq
          %v290 = vshrl.u32 %v289, 7
          %v291 = vlaneseq
          %v292 = vand.u32 %v291, 127
          %s293 = smul.u32 %s27, 1024
          %v294 = vmul.u32 %v290, 128
          %v295 = vstv %s293
          %v296 = vadd.s32 %v295, %v294
          %v297 = vadd.s32 %v296, %v292
          %vm298 = vcmp.lt.s32.totalorder %v297, 256
          %v299 = vld [vmem:[%s191] sm:$0xff]
          %v300 = vld [vmem:[%s182] sm:$0xff]
          %s301 = scalar_lea.vmem %s182, 8 [#allocation2]
          %v302 = vld [vmem:[%s301] sm:$0xff]
          %v303 = vmax.f32 %v300, %v302
          %s304 = scalar_lea.vmem %s182, 16 [#allocation2]
          %v305 = vld [vmem:[%s304] sm:$0xff]
          %v306 = vmax.f32 %v303, %v305
          %s307 = scalar_lea.vmem %s182, 24 [#allocation2]
          %v308 = vld [vmem:[%s307] sm:$0xff]
          %v309 = vmax.f32 %v306, %v308
          %v310 = vsub.f32 %v300, %v309
          %v311 = vmul.f32 %v310, 1.442695
          %v312 = vpow.pop %v311
          %v313 = vsub.f32 %v302, %v309
          %v314 = vmul.f32 %v313, 1.442695
          %v315 = vpow.pop %v314
          %v316 = vadd.f32 %v312, %v315
          %v317 = vsub.f32 %v305, %v309
          %v318 = vmul.f32 %v317, 1.442695
          %v319 = vpow.pop %v318
          %v320 = vadd.f32 %v316, %v319
          %v321 = vsub.f32 %v308, %v309
          %v322 = vmul.f32 %v321, 1.442695
          %v323 = vpow.pop %v322
          %v324 = vadd.f32 %v320, %v323
          %v325 = vrcp.pop %v324
          %v326 = vmul.f32 1.0, %v325
          %v327 = vmul.f32 %v312, %v326
          %v328 = vmul.f32 %v315, %v326
          %v329 = vsel %vm298, %v299, 0.0
          %v330 = vsel %vm298, %v327, 0.0
          %v331 = vsel %vm298, %v328, 0.0
          %v332 = vld [vmem:[%s216] sm:$0xff]
          %v333 = vadd.f32 %v329, 0.0
          %v334 = vadd.f32 %v332, %v333
          %335 = vst [vmem:[%s216] sm:$0xff] %v334
          %s336 = scalar_lea.vmem %s216, 8 [#allocation7]
          %v337 = vld [vmem:[%s336] sm:$0xff]
          %v338 = vadd.f32 %v330, 0.0
          %v339 = vadd.f32 %v337, %v338
          %340 = vst [vmem:[%s336] sm:$0xff] %v339
          %s341 = scalar_lea.vmem %s216, 16 [#allocation7]
          %v342 = vld [vmem:[%s341] sm:$0xff]
          %v343 = vmul.f32 %v330, %v329
          %v344 = vadd.f32 %v343, 0.0
          %v345 = vadd.f32 %v342, %v344
          %346 = vst [vmem:[%s341] sm:$0xff] %v345
          %s347 = scalar_lea.vmem %s216, 24 [#allocation7]
          %v348 = vld [vmem:[%s347] sm:$0xff]
          %v349 = vadd.f32 %v331, 0.0
          %v350 = vadd.f32 %v348, %v349
          %351 = vst [vmem:[%s347] sm:$0xff] %v350
          %s352 = scalar_lea.vmem %s216, 32 [#allocation7]
          %v353 = vld [vmem:[%s352] sm:$0xff]
          %v354 = vmul.f32 %v331, %v329
          %v355 = vadd.f32 %v354, 0.0
          %v356 = vadd.f32 %v353, %v355
          %357 = vst [vmem:[%s352] sm:$0xff] %v356
        $region48: #{tpu_custom_call.1} parent=27 // pred_fallthru
          _
        %s358 = sand.u32 %s98, 1
        %s359 = scalar_lea.sflag [#allocation4], %s358
        %s360 = sand.u32 %s98, 1
        %s361 = smul.addr %s360, 40
        %s362 = scalar_lea.vmem [#allocation7], %s361
        // Predicated region
        $region49: #{tpu_custom_call.1} parent=27 // pred_check
          %p363 = pneg %p108
        $region50: #{tpu_custom_call.1} parent=27 // pred_check_branch
          %365 = sbr.rel (%p363) target = $region52
        $region51: #{tpu_custom_call.1} parent=27 // pred_region
          %s367 = ssub.s32 640, 640
          %368 = vsyncadd %s359, %s367
          %s369 = smul.addr %s26, 5
          %s370 = smul.addr %s369, 128
          %s371 = scalar_lea.hbm %s2, %s370
          %s372 = sshll.u32 %s362, 4
          %s373 = int_to_ptr.vmem [resolvable:$true] %s372
          %378 = dma.vmem_to_hbm [thread:$0]  %s373, 640, %s371, %s359, 128, 128, 8
        $region52: #{tpu_custom_call.1} parent=27 // pred_fallthru
          _
      $region28: #{tpu_custom_call.1} parent=5 // pred_fallthru
        _
      %p379 = scmp.le.s32.totalorder 2, %s17
      // Predicated region
      $region53: #{tpu_custom_call.1} parent=5 // pred_check
        %p380 = pneg %p379
      $region54: #{tpu_custom_call.1} parent=5 // pred_check_branch
        %382 = sbr.rel (%p380) target = $region56
      $region55: #{tpu_custom_call.1} parent=5 // pred_region
        %s383 = ssub.s32 %s17, 2
        // Predicated region
        $region57: #{tpu_custom_call.1} parent=55 // pred_check
          %p384 = pneg %p114
        $region58: #{tpu_custom_call.1} parent=55 // pred_check_branch
          %386 = sbr.rel (%p384) target = $region60
        $region59: #{tpu_custom_call.1} parent=55 // pred_region
          %s387 = sand.u32 %s99, 1
          %s388 = scalar_lea.sflag [#allocation4], %s387
          %s389 = sand.u32 %s99, 1
          %s390 = smul.addr %s389, 40
          %s391 = scalar_lea.vmem [#allocation7], %s390
          %392 = dma.done %s388, 640
        $region60: #{tpu_custom_call.1} parent=55 // pred_fallthru
          _
      $region56: #{tpu_custom_call.1} parent=5 // pred_fallthru
        _
    $region6: #{tpu_custom_call.1} parent=1 // loop_footer
      %s21 = sadd.s32 1, %s17
    $region7: #{tpu_custom_call.1} parent=1 // loop_footer_branch
      %16 = sbr.rel target = $region3
    $region8: #{tpu_custom_call.1} parent=1 // loop_exit
      _
    %393 = vsyncpa [#allocation3], 1
    %s394 = scalar_lea.sflag [#allocation3], 1
    %395 = vsyncpa %s394, 1
    %396 = vsyncpa [#allocation6], 1
    %s397 = scalar_lea.sflag [#allocation6], 1
    %398 = vsyncpa %s397, 1
    %399 = vsyncpa [#allocation4], 1
    %s400 = scalar_lea.sflag [#allocation4], 1
    %401 = vsyncpa %s400, 1

</llo_original>
